<compile_context>
chip_gen: v7x
topology: tpu7x:2x2x1
jax: 0.10.0
libtpu: 0.0.40
codegen_flags: <defaults>
</compile_context>

<pallas_src>
import functools

import numpy as np
import jax
import jax.numpy as jnp
from jax.experimental import pallas as pl
from jax.experimental.pallas import tpu as pltpu

LANE = 128        # TPU lane width; padded feature / hidden / output width


# ----------------------------------------------------------------------------
# Plain-JAX pooling glue (traced once per score-matrix shape under jit).
# adaptive_avg_pool1d is expressed as a single matmul against a precomputed
# compile-time-constant averaging matrix.
# TODO(synk): per-sample ragged score matrices (different [N, M] per sample)
#             keep the sort + pooling in plain JAX; fusing ragged row-sort /
#             shape-dependent adaptive pooling into one Pallas kernel would
#             need bucketed padding + scalar-prefetched (N, M) masks.
# ----------------------------------------------------------------------------
def _avg_pool_matrix(in_size, out_size):
    """[in_size, out_size] f32: column j averages x[start_j:end_j]; matches
    torch.nn.functional.adaptive_avg_pool1d windowing exactly."""
    a = np.zeros((in_size, out_size), np.float32)
    for j in range(out_size):
        start = (j * in_size) // out_size
        end = -(-((j + 1) * in_size) // out_size)   # ceil((j+1)*L / out)
        a[start:end, j] = 1.0 / (end - start)
    return jnp.asarray(a)


def pool_jax(v, k):
    """v: [N, M] f32  ->  [3*k] f32 (matches torch `pool`)."""
    xs = jnp.sort(v, axis=1)                                    # [N, M]
    mid = xs @ _avg_pool_matrix(v.shape[1], k - 2)              # [N, k-2]
    xk = jnp.concatenate([xs[:, :1], mid, xs[:, -1:]], axis=1)  # [N, k]
    return jnp.concatenate(
        [jnp.min(xk, axis=0), jnp.mean(xk, axis=0), jnp.max(xk, axis=0)], axis=0
    )                                                           # [3k]


# ----------------------------------------------------------------------------
# Parameter packing: one bf16 slab [nlayers*LANE, LANE], bias folded.
# Layer i chunk (base = i*LANE):
#   rows base .. base+in_i-1 : W_i  (stored [in, out], zero-padded to LANE wide)
#   row  base+LANE-1         : bias_i in cols [:out], and 1.0 in col LANE-1
#                              (carries the constant-1 lane to the next layer)
# Zero padding keeps padded lanes exactly 0 through every layer; the constant
# lane stays exactly 1 through ReLU, so "+ bias" is absorbed into the matmul.
# ----------------------------------------------------------------------------
def pack_params(weights, biases, lane=LANE, dtype=jnp.bfloat16):
    nlayers = len(weights)
    slab = np.zeros((nlayers * lane, lane), np.float32)
    for i, (w, b) in enumerate(zip(weights, biases)):
        w = np.asarray(w, np.float32)
        b = np.asarray(b, np.float32).reshape(-1)
        din, dout = w.shape
        # lane-1 is reserved for the constant-1 / bias lane.
        assert din <= lane - 1 and dout <= lane - 1
        base = i * lane
        slab[base:base + din, :dout] = w
        slab[base + lane - 1, :dout] = b          # bias row (constant-1 input lane)
        slab[base + lane - 1, lane - 1] = 1.0     # keep constant lane == 1 at output
    return jnp.asarray(slab, dtype)


# ----------------------------------------------------------------------------
# Pallas kernel: fused MLP (Linear -> ReLU ... -> Linear) -> tanh * margin.
# Weights sliced from the packed bf16 slab with static 128-row-aligned views;
# matmuls run bf16 x bf16 -> f32 on the MXU, elementwise math stays f32.
# ----------------------------------------------------------------------------
def _make_mlp_tanh_kernel(nlayers, margin, lane):
    def kernel(h_ref, p_ref, o_ref):
        h = h_ref[...]                                          # [TB, lane] f32
        for i in range(nlayers):                                # static unroll
            w = p_ref[i * lane:(i + 1) * lane, :]               # [lane, lane] bf16
            acc = jnp.dot(h.astype(jnp.bfloat16), w,
                          preferred_element_type=jnp.float32)   # MXU, f32 acc
            h = jnp.maximum(acc, 0.0) if i < nlayers - 1 else acc
        o_ref[...] = jnp.tanh(h) * jnp.float32(margin)          # EUP tanh, dense vst
    return kernel


def mlp_tanh_pallas(h_padded, packed_params, nlayers, margin, tb):
    B, lane = h_padded.shape
    assert B % tb == 0
    kernel = _make_mlp_tanh_kernel(nlayers, margin, lane)
    cost = pl.CostEstimate(
        flops=2 * B * lane * lane * nlayers,
        transcendentals=B * lane,
        bytes_accessed=4 * h_padded.size + 2 * packed_params.size + 4 * B * lane,
    )
    return pl.pallas_call(
        kernel,
        out_shape=jax.ShapeDtypeStruct((B, lane), jnp.float32),
        grid=(B // tb,),
        in_specs=[
            pl.BlockSpec((tb, lane), lambda i: (i, 0)),               # batch block
            pl.BlockSpec(packed_params.shape, lambda i: (0, 0)),      # whole slab
        ],
        out_specs=pl.BlockSpec((tb, lane), lambda i: (i, 0)),
        compiler_params=pltpu.CompilerParams(
            dimension_semantics=("parallel",)),                       # both v7x TCs
        cost_estimate=cost,
    )(h_padded, packed_params)


# ----------------------------------------------------------------------------
# Full forward (equivalent of new.forward)
# ----------------------------------------------------------------------------
def new_forward(score_list, packed_params, *, nh, nh2, margin, nlayers, noutput):
    feats = [
        jnp.concatenate([pool_jax(v, nh), pool_jax(v.T, nh2)], axis=0)
        for v in score_list
    ]
    h = jnp.stack(feats, axis=0)                         # [B, 3*(nh+nh2)]
    B, ninput = h.shape
    assert ninput <= LANE - 1                            # lane 127 reserved
    # pad batch to >=8 sublanes (and a multiple of the batch tile), pad lanes to 127
    if B <= 256:
        b_pad = max(8, ((B + 7) // 8) * 8)
        tb = b_pad
    else:
        tb = 256
        b_pad = ((B + tb - 1) // tb) * tb
    h = jnp.pad(h, ((0, b_pad - B), (0, LANE - 1 - ninput)))
    h = jnp.concatenate([h, jnp.ones((b_pad, 1), jnp.float32)], axis=1)  # const-1 lane
    out = mlp_tanh_pallas(h, packed_params, nlayers, margin, tb)         # [b_pad, 128]
    return out[:B, :noutput]                                             # [B, 2]


# ----------------------------------------------------------------------------
# Pure-JAX f32 reference (PyTorch semantics) — used to validate bf16 weights.
# ----------------------------------------------------------------------------
def reference_forward(score_list, weights, biases, *, nh, nh2, margin):
    feats = [
        jnp.concatenate([pool_jax(v, nh), pool_jax(v.T, nh2)], axis=0)
        for v in score_list
    ]
    h = jnp.stack(feats, axis=0)
    for i, (w, b) in enumerate(zip(weights, biases)):
        h = h @ w + b.reshape(1, -1)
        if i < len(weights) - 1:
            h = jnp.maximum(h, 0.0)
    return jnp.tanh(h) * margin


# ----------------------------------------------------------------------------
# Deterministic parameter init (shapes from MLP(3*(nh+nh2), nh3, 2, nlayers2))
# ----------------------------------------------------------------------------
def init_params(key, ninput, nh3, noutput, nlayers):
    if nlayers == 1:
        dims = [ninput, noutput]
    else:
        dims = [ninput] + [nh3] * (nlayers - 1) + [noutput]
    weights, biases = [], []
    for i in range(len(dims) - 1):
        key, kw, kb = jax.random.split(key, 3)
        bound = 1.0 / float(np.sqrt(dims[i]))
        weights.append(
            jax.random.uniform(kw, (dims[i], dims[i + 1]), jnp.float32, -bound, bound)
        )
        biases.append(
            jax.random.uniform(kb, (1, dims[i + 1]), jnp.float32, -bound, bound)
        )
    return {"weights": weights, "biases": biases}


if __name__ == "__main__":
    # hyper-params (params.nh, params.nh2, params.nh3, params.nlayers2, params.margin)
    nh, nh2, nh3, nlayers2, margin = 6, 5, 32, 3, 1.0
    ninput = 3 * (nh + nh2)   # 33
    noutput = 2

    key = jax.random.PRNGKey(0)
    key, k1, k2 = jax.random.split(key, 3)
    # data_batch['score']: list of 2-D score matrices (variable shapes allowed)
    score_list = [
        jax.random.normal(k1, (12, 10), jnp.float32),
        jax.random.normal(k2, (9, 14), jnp.float32),
    ]

    params = init_params(key, ninput, nh3, noutput, nlayers2)
    packed = pack_params(params["weights"], params["biases"])   # bf16 slab, packed once

    fwd = jax.jit(functools.partial(
        new_forward, nh=nh, nh2=nh2, margin=margin,
        nlayers=nlayers2, noutput=noutput))

    out = fwd(score_list, packed)
    out = jax.block_until_ready(out)

    assert out.shape == (len(score_list), 2) and out.dtype == jnp.float32
    assert bool(jnp.all(jnp.isfinite(out)))

    # bf16-weight tolerance check against the f32 reference (review item).
    ref = reference_forward(score_list, params["weights"], params["biases"],
                            nh=nh, nh2=nh2, margin=margin)
    ref = jax.block_until_ready(ref)
    assert float(jnp.max(jnp.abs(out - ref))) < 5e-2

    print("KERNEL_OK")
</pallas_src>

<mosaic_0001>
module attributes {stable_mosaic.version = 11 : i64} {
  func.func @kernel(%arg0: i32, %arg1: memref<8x128xf32, #tpu.memory_space<vmem>>, %arg2: memref<384x128xbf16, #tpu.memory_space<vmem>>, %arg3: memref<8x128xf32, #tpu.memory_space<vmem>>) attributes {dimension_semantics = [#tpu.dimension_semantics<parallel>], iteration_bounds = array<i64: 1>, scalar_prefetch = 0 : i64, scratch_operands = 0 : i64, tpu.core_type = #tpu.core_type<tc>, window_params = [{transform_indices = @transform_0, window_bounds = array<i64: 8, 128>}, {pipeline_mode = #tpu.pipeline_mode<synchronous>, transform_indices = @transform_1, window_bounds = array<i64: 384, 128>}, {transform_indices = @transform_2, window_bounds = array<i64: 8, 128>}]} {
    %c0 = arith.constant 0 : index
    %c0_0 = arith.constant 0 : index
    %0 = vector.load %arg1[%c0, %c0_0] : memref<8x128xf32, #tpu.memory_space<vmem>>, vector<8x128xf32>
    %c0_1 = arith.constant 0 : index
    %c0_2 = arith.constant 0 : index
    %1 = vector.load %arg2[%c0_1, %c0_2] : memref<384x128xbf16, #tpu.memory_space<vmem>>, vector<128x128xbf16>
    %2 = arith.truncf %0 : vector<8x128xf32> to vector<8x128xbf16>
    %cst = arith.constant dense<0.000000e+00> : vector<8x128xf32>
    %3 = tpu.matmul %2, %1, %cst {dimension_numbers = #tpu.dot_dimension_numbers<[1], [0], [0], [1], [0, 0, 1, 1], [], []>} : vector<8x128xbf16>, vector<128x128xbf16>, vector<8x128xf32> -> vector<8x128xf32>
    %cst_3 = arith.constant 0.000000e+00 : f32
    %4 = vector.broadcast %cst_3 : f32 to vector<8x128xf32>
    %5 = arith.maximumf %3, %4 : vector<8x128xf32>
    %c128 = arith.constant 128 : index
    %c0_4 = arith.constant 0 : index
    %6 = vector.load %arg2[%c128, %c0_4] : memref<384x128xbf16, #tpu.memory_space<vmem>>, vector<128x128xbf16>
    %7 = arith.truncf %5 : vector<8x128xf32> to vector<8x128xbf16>
    %cst_5 = arith.constant dense<0.000000e+00> : vector<8x128xf32>
    %8 = tpu.matmul %7, %6, %cst_5 {dimension_numbers = #tpu.dot_dimension_numbers<[1], [0], [0], [1], [0, 0, 1, 1], [], []>} : vector<8x128xbf16>, vector<128x128xbf16>, vector<8x128xf32> -> vector<8x128xf32>
    %cst_6 = arith.constant 0.000000e+00 : f32
    %9 = vector.broadcast %cst_6 : f32 to vector<8x128xf32>
    %10 = arith.maximumf %8, %9 : vector<8x128xf32>
    %c256 = arith.constant 256 : index
    %c0_7 = arith.constant 0 : index
    %11 = vector.load %arg2[%c256, %c0_7] : memref<384x128xbf16, #tpu.memory_space<vmem>>, vector<128x128xbf16>
    %12 = arith.truncf %10 : vector<8x128xf32> to vector<8x128xbf16>
    %cst_8 = arith.constant dense<0.000000e+00> : vector<8x128xf32>
    %13 = tpu.matmul %12, %11, %cst_8 {dimension_numbers = #tpu.dot_dimension_numbers<[1], [0], [0], [1], [0, 0, 1, 1], [], []>} : vector<8x128xbf16>, vector<128x128xbf16>, vector<8x128xf32> -> vector<8x128xf32>
    %14 = math.tanh %13 : vector<8x128xf32>
    %cst_9 = arith.constant 1.000000e+00 : f32
    %15 = vector.broadcast %cst_9 : f32 to vector<8x128xf32>
    %16 = arith.mulf %14, %15 : vector<8x128xf32>
    %c0_10 = arith.constant 0 : index
    %c0_11 = arith.constant 0 : index
    %17 = vector.load %arg3[%c0_10, %c0_11] : memref<8x128xf32, #tpu.memory_space<vmem>>, vector<8x128xf32>
    tpu.vector_store %arg3[%c0_10, %c0_11], %16 {strides = array<i32>} : memref<8x128xf32, #tpu.memory_space<vmem>>, vector<8x128xf32>,
    return
  }
  func.func @transform_0(%arg0: i32) -> (i32, i32) {
    %c0_i32 = arith.constant 0 : i32
    %c0_i32_0 = arith.constant 0 : i32
    return %arg0, %c0_i32 : i32, i32
  }
  func.func @transform_1(%arg0: i32) -> (i32, i32) {
    %c0_i32 = arith.constant 0 : i32
    %c0_i32_0 = arith.constant 0 : i32
    %c0_i32_1 = arith.constant 0 : i32
    return %c0_i32, %c0_i32_0 : i32, i32
  }
  func.func @transform_2(%arg0: i32) -> (i32, i32) {
    %c0_i32 = arith.constant 0 : i32
    %c0_i32_0 = arith.constant 0 : i32
    return %arg0, %c0_i32 : i32, i32
  }
}

</mosaic_0001>

<llo_original>
// kernel: new_forward.1
$region0: #{new_forward.1}
  #allocation0 [shape = 'u32[]', space=smem, size = 0x4, offset = 0x4, fixed_abs, tag = 'smem constant byte address 0x4 - core index']
  #allocation1 [shape = 'u32[144,128]{1,0:T(1,128)}', space=vmem, size = 0x12000, scoped, tag = 'internal scratch']
  %s0 = inlined_call_operand.vmem [shape: f32[8,128], index: 0, kind: input, shape index: {}]
  %s1 = inlined_call_operand.vmem [shape: bf16[384,128], index: 1, kind: input, shape index: {}]
  %s2 = inlined_call_operand.vmem [shape: f32[8,128], index: 2, kind: output, shape index: {}]
  %s3 = sld [smem:[#allocation0]]
  $region18: #{new_forward.1} parent=0
    _
  %s5 = ssub.s32 1, %s3
  %s6 = scalar_select 0, %s5, %s3
  // Predicated region
  $region2: #{new_forward.1} parent=0 // pred_check
    _
  $region3: #{new_forward.1} parent=0 // pred_check_branch
    %8 = sbr.rel (0) target = $region5
  $region4: #{new_forward.1} parent=0 // pred_region
    _
  $region5: #{new_forward.1} parent=0 // pred_fallthru
    _
  // Predicated region
  $region6: #{new_forward.1} parent=0 // pred_check
    _
  $region7: #{new_forward.1} parent=0 // pred_check_branch
    %10 = sbr.rel (0) target = $region9
  $region8: #{new_forward.1} parent=0 // pred_region
    _
  $region9: #{new_forward.1} parent=0 // pred_fallthru
    _
  %v12 = vld [vmem:[%s0] sm:$0xff]
  %v13 = vld [vmem:[%s1] sm:$0xf]
  %v14 = vld [vmem:[%s1 + $0x4] sm:$0xf]
  %v15 = vld [vmem:[%s1 + $0x8] sm:$0xf]
  %v16 = vld [vmem:[%s1 + $0xc] sm:$0xf]
  %v17 = vld [vmem:[%s1 + $0x10] sm:$0xf]
  %v18 = vld [vmem:[%s1 + $0x14] sm:$0xf]
  %v19 = vld [vmem:[%s1 + $0x18] sm:$0xf]
  %v20 = vld [vmem:[%s1 + $0x1c] sm:$0xf]
  %v21 = vld [vmem:[%s1 + $0x20] sm:$0xf]
  %v22 = vld [vmem:[%s1 + $0x24] sm:$0xf]
  %v23 = vld [vmem:[%s1 + $0x28] sm:$0xf]
  %v24 = vld [vmem:[%s1 + $0x2c] sm:$0xf]
  %v25 = vld [vmem:[%s1 + $0x30] sm:$0xf]
  %v26 = vld [vmem:[%s1 + $0x34] sm:$0xf]
  %v27 = vld [vmem:[%s1 + $0x38] sm:$0xf]
  %v28 = vld [vmem:[%s1 + $0x3c] sm:$0xf]
  %v29 = vpack.c.bf16 %v12, %v12
  %v46 = vunpack.c.l.b16 %v13
  %v47 = vunpack.c.l.b16 %v14
  %v48 = vunpack.c.l.b16 %v15
  %v49 = vunpack.c.l.b16 %v16
  %v50 = vunpack.c.l.b16 %v17
  %v51 = vunpack.c.l.b16 %v18
  %v52 = vunpack.c.l.b16 %v19
  %v53 = vunpack.c.l.b16 %v20
  %v54 = vunpack.c.l.b16 %v21
  %v55 = vunpack.c.l.b16 %v22
  %v56 = vunpack.c.l.b16 %v23
  %v57 = vunpack.c.l.b16 %v24
  %v58 = vunpack.c.l.b16 %v25
  %v59 = vunpack.c.l.b16 %v26
  %v60 = vunpack.c.l.b16 %v27
  %v61 = vunpack.c.l.b16 %v28
  %v62 = vpack.c.b16 %v47, %v46
  %v63 = vpack.c.b16 %v49, %v48
  %v64 = vpack.c.b16 %v51, %v50
  %v65 = vpack.c.b16 %v53, %v52
  %v66 = vpack.c.b16 %v55, %v54
  %v67 = vpack.c.b16 %v57, %v56
  %v68 = vpack.c.b16 %v59, %v58
  %v69 = vpack.c.b16 %v61, %v60
  %78 = vmatprep.subr.bf16.mxu0 0
  %79 = vmatpush1.bf16.msra.mxu0 %v62
  %80 = vmatprep.subr.bf16.mxu0 0
  %81 = vmatpush1.bf16.msra.mxu0 %v63
  %82 = vmatprep.subr.bf16.mxu0 0
  %83 = vmatpush1.bf16.msra.mxu0 %v64
  %84 = vmatprep.subr.bf16.mxu0 0
  %85 = vmatpush1.bf16.msra.mxu0 %v65
  %86 = vmatprep.subr.bf16.mxu0 0
  %87 = vmatpush1.bf16.msra.mxu0 %v66
  %88 = vmatprep.subr.bf16.mxu0 0
  %89 = vmatpush1.bf16.msra.mxu0 %v67
  %90 = vmatprep.subr.bf16.mxu0 0
  %91 = vmatpush1.bf16.msra.mxu0 %v68
  %92 = vmatprep.subr.bf16.mxu0 0
  %93 = vmatpush1.bf16.msra.mxu0 %v69
  %94 = vmatprep.subr.bf16.mxu0 0
  %95 = vmatpush1.bf16.msra.mxu0 0
  %96 = vmatprep.subr.bf16.mxu0 0
  %97 = vmatpush1.bf16.msra.mxu0 0
  %98 = vmatprep.subr.bf16.mxu0 0
  %99 = vmatpush1.bf16.msra.mxu0 0
  %100 = vmatprep.subr.bf16.mxu0 0
  %101 = vmatpush1.bf16.msra.mxu0 0
  %102 = vmatprep.subr.bf16.mxu0 0
  %103 = vmatpush1.bf16.msra.mxu0 0
  %104 = vmatprep.subr.bf16.mxu0 0
  %105 = vmatpush1.bf16.msra.mxu0 0
  %106 = vmatprep.subr.bf16.mxu0 0
  %107 = vmatpush1.bf16.msra.mxu0 0
  %108 = vmatprep.subr.bf16.mxu0 0
  %109 = vmatpush1.bf16.msra.mxu0 0
  %110 = vmatprep.mubr.bf16.mxu0 0
  %111 = vmatmul.mubr.bf16.gmra.mrb[0].mxu0 %v29
  %v112 = vpop.f32.mrb[0].mxu0
  %v113 = vadd.f32 0.0, %v112
  %v114 = vpop.f32.mrb[0].mxu0
  %v115 = vpop.f32.mrb[0].mxu0
  %v116 = vpop.f32.mrb[0].mxu0
  %117 = vdwg.mxu0
  %v118 = vmax.f32 %v113, 0.0
  %v119 = vld [vmem:[%s1 + $0x40] sm:$0xf]
  %v120 = vld [vmem:[%s1 + $0x44] sm:$0xf]
  %v121 = vld [vmem:[%s1 + $0x48] sm:$0xf]
  %v122 = vld [vmem:[%s1 + $0x4c] sm:$0xf]
  %v123 = vld [vmem:[%s1 + $0x50] sm:$0xf]
  %v124 = vld [vmem:[%s1 + $0x54] sm:$0xf]
  %v125 = vld [vmem:[%s1 + $0x58] sm:$0xf]
  %v126 = vld [vmem:[%s1 + $0x5c] sm:$0xf]
  %v127 = vld [vmem:[%s1 + $0x60] sm:$0xf]
  %v128 = vld [vmem:[%s1 + $0x64] sm:$0xf]
  %v129 = vld [vmem:[%s1 + $0x68] sm:$0xf]
  %v130 = vld [vmem:[%s1 + $0x6c] sm:$0xf]
  %v131 = vld [vmem:[%s1 + $0x70] sm:$0xf]
  %v132 = vld [vmem:[%s1 + $0x74] sm:$0xf]
  %v133 = vld [vmem:[%s1 + $0x78] sm:$0xf]
  %v134 = vld [vmem:[%s1 + $0x7c] sm:$0xf]
  %v135 = vpack.c.bf16 %v118, %v118
  %v152 = vunpack.c.l.b16 %v119
  %v153 = vunpack.c.l.b16 %v120
  %v154 = vunpack.c.l.b16 %v121
  %v155 = vunpack.c.l.b16 %v122
  %v156 = vunpack.c.l.b16 %v123
  %v157 = vunpack.c.l.b16 %v124
  %v158 = vunpack.c.l.b16 %v125
  %v159 = vunpack.c.l.b16 %v126
  %v160 = vunpack.c.l.b16 %v127
  %v161 = vunpack.c.l.b16 %v128
  %v162 = vunpack.c.l.b16 %v129
  %v163 = vunpack.c.l.b16 %v130
  %v164 = vunpack.c.l.b16 %v131
  %v165 = vunpack.c.l.b16 %v132
  %v166 = vunpack.c.l.b16 %v133
  %v167 = vunpack.c.l.b16 %v134
  %v168 = vpack.c.b16 %v153, %v152
  %v169 = vpack.c.b16 %v155, %v154
  %v170 = vpack.c.b16 %v157, %v156
  %v171 = vpack.c.b16 %v159, %v158
  %v172 = vpack.c.b16 %v161, %v160
  %v173 = vpack.c.b16 %v163, %v162
  %v174 = vpack.c.b16 %v165, %v164
  %v175 = vpack.c.b16 %v167, %v166
  %184 = vmatprep.subr.bf16.mxu0 0
  %185 = vmatpush1.bf16.msra.mxu0 %v168
  %186 = vmatprep.subr.bf16.mxu0 0
  %187 = vmatpush1.bf16.msra.mxu0 %v169
  %188 = vmatprep.subr.bf16.mxu0 0
  %189 = vmatpush1.bf16.msra.mxu0 %v170
  %190 = vmatprep.subr.bf16.mxu0 0
  %191 = vmatpush1.bf16.msra.mxu0 %v171
  %192 = vmatprep.subr.bf16.mxu0 0
  %193 = vmatpush1.bf16.msra.mxu0 %v172
  %194 = vmatprep.subr.bf16.mxu0 0
  %195 = vmatpush1.bf16.msra.mxu0 %v173
  %196 = vmatprep.subr.bf16.mxu0 0
  %197 = vmatpush1.bf16.msra.mxu0 %v174
  %198 = vmatprep.subr.bf16.mxu0 0
  %199 = vmatpush1.bf16.msra.mxu0 %v175
  %200 = vmatprep.subr.bf16.mxu0 0
  %201 = vmatpush1.bf16.msra.mxu0 0
  %202 = vmatprep.subr.bf16.mxu0 0
  %203 = vmatpush1.bf16.msra.mxu0 0
  %204 = vmatprep.subr.bf16.mxu0 0
  %205 = vmatpush1.bf16.msra.mxu0 0
  %206 = vmatprep.subr.bf16.mxu0 0
  %207 = vmatpush1.bf16.msra.mxu0 0
  %208 = vmatprep.subr.bf16.mxu0 0
  %209 = vmatpush1.bf16.msra.mxu0 0
  %210 = vmatprep.subr.bf16.mxu0 0
  %211 = vmatpush1.bf16.msra.mxu0 0
  %212 = vmatprep.subr.bf16.mxu0 0
  %213 = vmatpush1.bf16.msra.mxu0 0
  %214 = vmatprep.subr.bf16.mxu0 0
  %215 = vmatpush1.bf16.msra.mxu0 0
  %216 = vmatprep.mubr.bf16.mxu0 0
  %217 = vmatmul.mubr.bf16.gmra.mrb[0].mxu0 %v135
  %v218 = vpop.f32.mrb[0].mxu0
  %v219 = vadd.f32 0.0, %v218
  %v220 = vpop.f32.mrb[0].mxu0
  %v221 = vpop.f32.mrb[0].mxu0
  %v222 = vpop.f32.mrb[0].mxu0
  %223 = vdwg.mxu0
  %v224 = vmax.f32 %v219, 0.0
  %v225 = vld [vmem:[%s1 + $0x80] sm:$0xf]
  %v226 = vld [vmem:[%s1 + $0x84] sm:$0xf]
  %v227 = vld [vmem:[%s1 + $0x88] sm:$0xf]
  %v228 = vld [vmem:[%s1 + $0x8c] sm:$0xf]
  %v229 = vld [vmem:[%s1 + $0x90] sm:$0xf]
  %v230 = vld [vmem:[%s1 + $0x94] sm:$0xf]
  %v231 = vld [vmem:[%s1 + $0x98] sm:$0xf]
  %v232 = vld [vmem:[%s1 + $0x9c] sm:$0xf]
  %v233 = vld [vmem:[%s1 + $0xa0] sm:$0xf]
  %v234 = vld [vmem:[%s1 + $0xa4] sm:$0xf]
  %v235 = vld [vmem:[%s1 + $0xa8] sm:$0xf]
  %v236 = vld [vmem:[%s1 + $0xac] sm:$0xf]
  %v237 = vld [vmem:[%s1 + $0xb0] sm:$0xf]
  %v238 = vld [vmem:[%s1 + $0xb4] sm:$0xf]
  %v239 = vld [vmem:[%s1 + $0xb8] sm:$0xf]
  %v240 = vld [vmem:[%s1 + $0xbc] sm:$0xf]
  %v241 = vpack.c.bf16 %v224, %v224
  %v258 = vunpack.c.l.b16 %v225
  %v259 = vunpack.c.l.b16 %v226
  %v260 = vunpack.c.l.b16 %v227
  %v261 = vunpack.c.l.b16 %v228
  %v262 = vunpack.c.l.b16 %v229
  %v263 = vunpack.c.l.b16 %v230
  %v264 = vunpack.c.l.b16 %v231
  %v265 = vunpack.c.l.b16 %v232
  %v266 = vunpack.c.l.b16 %v233
  %v267 = vunpack.c.l.b16 %v234
  %v268 = vunpack.c.l.b16 %v235
  %v269 = vunpack.c.l.b16 %v236
  %v270 = vunpack.c.l.b16 %v237
  %v271 = vunpack.c.l.b16 %v238
  %v272 = vunpack.c.l.b16 %v239
  %v273 = vunpack.c.l.b16 %v240
  %v274 = vpack.c.b16 %v259, %v258
  %v275 = vpack.c.b16 %v261, %v260
  %v276 = vpack.c.b16 %v263, %v262
  %v277 = vpack.c.b16 %v265, %v264
  %v278 = vpack.c.b16 %v267, %v266
  %v279 = vpack.c.b16 %v269, %v268
  %v280 = vpack.c.b16 %v271, %v270
  %v281 = vpack.c.b16 %v273, %v272
  %290 = vmatprep.subr.bf16.mxu0 0
  %291 = vmatpush1.bf16.msra.mxu0 %v274
  %292 = vmatprep.subr.bf16.mxu0 0
  %293 = vmatpush1.bf16.msra.mxu0 %v275
  %294 = vmatprep.subr.bf16.mxu0 0
  %295 = vmatpush1.bf16.msra.mxu0 %v276
  %296 = vmatprep.subr.bf16.mxu0 0
  %297 = vmatpush1.bf16.msra.mxu0 %v277
  %298 = vmatprep.subr.bf16.mxu0 0
  %299 = vmatpush1.bf16.msra.mxu0 %v278
  %300 = vmatprep.subr.bf16.mxu0 0
  %301 = vmatpush1.bf16.msra.mxu0 %v279
  %302 = vmatprep.subr.bf16.mxu0 0
  %303 = vmatpush1.bf16.msra.mxu0 %v280
  %304 = vmatprep.subr.bf16.mxu0 0
  %305 = vmatpush1.bf16.msra.mxu0 %v281
  %306 = vmatprep.subr.bf16.mxu0 0
  %307 = vmatpush1.bf16.msra.mxu0 0
  %308 = vmatprep.subr.bf16.mxu0 0
  %309 = vmatpush1.bf16.msra.mxu0 0
  %310 = vmatprep.subr.bf16.mxu0 0
  %311 = vmatpush1.bf16.msra.mxu0 0
  %312 = vmatprep.subr.bf16.mxu0 0
  %313 = vmatpush1.bf16.msra.mxu0 0
  %314 = vmatprep.subr.bf16.mxu0 0
  %315 = vmatpush1.bf16.msra.mxu0 0
  %316 = vmatprep.subr.bf16.mxu0 0
  %317 = vmatpush1.bf16.msra.mxu0 0
  %318 = vmatprep.subr.bf16.mxu0 0
  %319 = vmatpush1.bf16.msra.mxu0 0
  %320 = vmatprep.subr.bf16.mxu0 0
  %321 = vmatpush1.bf16.msra.mxu0 0
  %322 = vmatprep.mubr.bf16.mxu0 0
  %323 = vmatmul.mubr.bf16.gmra.mrb[0].mxu0 %v241
  %v324 = vpop.f32.mrb[0].mxu0
  %v325 = vadd.f32 0.0, %v324
  %v326 = vpop.f32.mrb[0].mxu0
  %v327 = vpop.f32.mrb[0].mxu0
  %v328 = vpop.f32.mrb[0].mxu0
  %329 = vdwg.mxu0
  %v330 = vtanh.pop %v325
  %331 = vst [vmem:[%s2] sm:$0xff] %v330
  // Predicated region
  $region10: #{new_forward.1} parent=0 // pred_check
    _
  $region11: #{new_forward.1} parent=0 // pred_check_branch
    %333 = sbr.rel (0) target = $region13
  $region12: #{new_forward.1} parent=0 // pred_region
    _
  $region13: #{new_forward.1} parent=0 // pred_fallthru
    _
  // Predicated region
  $region14: #{new_forward.1} parent=0 // pred_check
    _
  $region15: #{new_forward.1} parent=0 // pred_check_branch
    %335 = sbr.rel (0) target = $region17
  $region16: #{new_forward.1} parent=0 // pred_region
    _
  $region17: #{new_forward.1} parent=0 // pred_fallthru
    _

</llo_original>
